<compile_context>
chip_gen: v6e
topology: v6e:2x2x1
jax: 0.10.0
libtpu: 0.0.40
codegen_flags: <defaults>
</compile_context>

<pallas_src>
import jax
import jax.numpy as jnp
from jax.experimental import pallas as pl
from jax.experimental.pallas import tpu as pltpu

BN_EPS = 1e-5
H1, H2 = 400, 300          # logical hidden sizes (PyTorch module)
H1P, H2P = 512, 384        # lane-padded hidden sizes (multiples of 128)


def _fc1_stats_kernel(states_ref, w1_ref, h1_ref, sum_ref, sq_ref):
    # fc1 (bias dropped: cancelled by training-mode BatchNorm). bf16 operands,
    # f32 accumulation on the MXU.
    h1 = jnp.dot(states_ref[...], w1_ref[...],
                 preferred_element_type=jnp.float32)            # (TB, H1P) f32
    h1_ref[...] = h1
    # Per-tile partial sums for the full-batch BN statistics.
    sum_ref[...] = jnp.sum(h1, axis=0, keepdims=True)[None]      # (1, 1, H1P)
    sq_ref[...] = jnp.sum(h1 * h1, axis=0, keepdims=True)[None]  # (1, 1, H1P)


def _bn_fc2_fc3_kernel(h1_ref, actions_ref, scale_ref, shift_ref,
                       w2s_ref, w2a_ref, b2_ref, w3_ref, b3_ref, out_ref):
    # BatchNorm folded into one FMA, then ReLU.
    h1n = jnp.maximum(h1_ref[...] * scale_ref[...] + shift_ref[...], 0.0)
    # fc2 over the implicit concat [h1n, actions]; big matmul in bf16 on MXU.
    h2 = (jnp.dot(h1n.astype(jnp.bfloat16), w2s_ref[...],
                  preferred_element_type=jnp.float32)
          + jnp.dot(actions_ref[...], w2a_ref[...],
                    preferred_element_type=jnp.float32)
          + b2_ref[...])
    h2 = jnp.maximum(h2, 0.0)
    # fc3 (N=1) as a lane reduction instead of a degenerate MXU matmul; b3 is a
    # scalar living in SMEM.
    out_ref[...] = (jnp.sum(h2 * w3_ref[...], axis=-1, keepdims=True)
                    + b3_ref[0, 0])


def critic_forward(states, actions, kparams, *, batch_tile=128):
    B, S = states.shape
    A = actions.shape[1]
    # Batch tiling. BN stats are aggregated across tiles, so tiling never
    # changes the statistics. If B is not a multiple of the tile, fall back to
    # a single full-batch tile (padding the batch would corrupt BN stats).
    TB = batch_tile if B % batch_tile == 0 else B
    T = B // TB

    parallel = pltpu.CompilerParams(dimension_semantics=("parallel",))

    h1, psum, psq = pl.pallas_call(
        _fc1_stats_kernel,
        grid=(T,),
        out_shape=(jax.ShapeDtypeStruct((B, H1P), jnp.float32),
                   jax.ShapeDtypeStruct((T, 1, H1P), jnp.float32),
                   jax.ShapeDtypeStruct((T, 1, H1P), jnp.float32)),
        in_specs=[pl.BlockSpec((TB, S), lambda i: (i, 0)),
                  pl.BlockSpec((S, H1P), lambda i: (0, 0))],
        out_specs=(pl.BlockSpec((TB, H1P), lambda i: (i, 0)),
                   pl.BlockSpec((1, 1, H1P), lambda i: (i, 0, 0)),
                   pl.BlockSpec((1, 1, H1P), lambda i: (i, 0, 0))),
        compiler_params=parallel,
    )(states.astype(jnp.bfloat16), kparams["w1"])

    # Finalize full-batch BatchNorm statistics and fold the affine (tiny work).
    mean = jnp.sum(psum[:, 0, :], axis=0, keepdims=True) / B      # (1, H1P)
    ex2 = jnp.sum(psq[:, 0, :], axis=0, keepdims=True) / B
    var = jnp.maximum(ex2 - mean * mean, 0.0)                      # biased var
    scale = kparams["gamma"] * jax.lax.rsqrt(var + BN_EPS)         # (1, H1P)
    shift = kparams["beta"] - mean * scale

    out = pl.pallas_call(
        _bn_fc2_fc3_kernel,
        grid=(T,),
        out_shape=jax.ShapeDtypeStruct((B, 1), jnp.float32),
        in_specs=[pl.BlockSpec((TB, H1P), lambda i: (i, 0)),
                  pl.BlockSpec((TB, A), lambda i: (i, 0)),
                  pl.BlockSpec((1, H1P), lambda i: (0, 0)),
                  pl.BlockSpec((1, H1P), lambda i: (0, 0)),
                  pl.BlockSpec((H1P, H2P), lambda i: (0, 0)),
                  pl.BlockSpec((A, H2P), lambda i: (0, 0)),
                  pl.BlockSpec((1, H2P), lambda i: (0, 0)),
                  pl.BlockSpec((1, H2P), lambda i: (0, 0)),
                  pl.BlockSpec(memory_space=pltpu.MemorySpace.SMEM)],
        out_specs=pl.BlockSpec((TB, 1), lambda i: (i, 0)),
        compiler_params=parallel,
    )(h1, actions, scale, shift,
      kparams["w2s"], kparams["w2a"], kparams["b2"],
      kparams["w3"], kparams["b3"])
    return out


def init_params(key, state_length, action_length):
    """PyTorch-faithful parameters (weights pre-transposed to (in, out)), f32."""
    S, A = state_length, action_length
    ks = jax.random.split(key, 6)

    def uni(k, shape, rng):
        return jax.random.uniform(k, shape, jnp.float32, -rng, rng)

    # weight_range() in the reference uses weight.size()[0] == out_features.
    r1 = 1.0 / (H1 ** 0.5)
    r2 = 1.0 / (H2 ** 0.5)
    r3 = 0.003
    # Biases keep PyTorch's default Linear init: U(-1/sqrt(fan_in), 1/sqrt(fan_in)).
    b1r = 1.0 / (S ** 0.5)
    b2r = 1.0 / ((H1 + A) ** 0.5)
    b3r = 1.0 / (H2 ** 0.5)

    return {
        "w1": uni(ks[0], (S, H1), r1),           # fc1.weight.T
        "b1": uni(ks[1], (1, H1), b1r),          # cancelled by BN; kept for ref
        "gamma": jnp.ones((1, H1), jnp.float32),
        "beta": jnp.zeros((1, H1), jnp.float32),
        "w2": uni(ks[2], (H1 + A, H2), r2),      # fc2.weight.T
        "b2": uni(ks[3], (1, H2), b2r),
        "w3": uni(ks[4], (1, H2), r3),           # fc3.weight as a (1, 300) row
        "b3": uni(ks[5], (1, 1), b3r),
    }


def pack_params(params):
    """Pad to lane-aligned shapes and cast the big MXU weights to bf16."""
    def pad_to(x, rows, cols):
        return jnp.pad(x, ((0, rows - x.shape[0]), (0, cols - x.shape[1])))

    w2 = params["w2"]
    A = w2.shape[0] - H1
    S = params["w1"].shape[0]
    return {
        "w1": pad_to(params["w1"], S, H1P).astype(jnp.bfloat16),
        "gamma": pad_to(params["gamma"], 1, H1P),   # zero pad -> pad cols stay 0
        "beta": pad_to(params["beta"], 1, H1P),
        "w2s": pad_to(w2[:H1], H1P, H2P).astype(jnp.bfloat16),
        "w2a": pad_to(w2[H1:], A, H2P),
        "b2": pad_to(params["b2"], 1, H2P),
        "w3": pad_to(params["w3"], 1, H2P),
        "b3": params["b3"],
    }


def critic_reference(states, actions, params):
    """Plain-JAX, f32, PyTorch-faithful reference (training-mode BatchNorm)."""
    h1 = states @ params["w1"] + params["b1"]
    mean = jnp.mean(h1, axis=0, keepdims=True)
    var = jnp.mean((h1 - mean) ** 2, axis=0, keepdims=True)
    h1 = (h1 - mean) * jax.lax.rsqrt(var + BN_EPS) * params["gamma"] + params["beta"]
    h1 = jnp.maximum(h1, 0.0)
    x = jnp.concatenate([h1, actions], axis=1)
    h2 = jnp.maximum(x @ params["w2"] + params["b2"], 0.0)
    return h2 @ params["w3"].T + params["b3"]


if __name__ == "__main__":
    key = jax.random.PRNGKey(0)
    k_params, k_states, k_actions = jax.random.split(key, 3)

    batch = 256              # tiled as 2 x 128 over the "parallel" grid
    state_length = 16
    action_length = 4

    params = init_params(k_params, state_length, action_length)
    kparams = pack_params(params)
    states = jax.random.normal(k_states, (batch, state_length), jnp.float32)
    actions = jax.random.normal(k_actions, (batch, action_length), jnp.float32)

    out = critic_forward(states, actions, kparams, batch_tile=128)
    out = jax.block_until_ready(out)

    ref = critic_reference(states, actions, params)
    assert out.shape == (batch, 1)
    # bf16 MXU operands -> slightly looser tolerance vs the f32 reference.
    assert jnp.allclose(out, ref, atol=5e-3, rtol=5e-2), \
        float(jnp.max(jnp.abs(out - ref)))
    print("KERNEL_OK")
</pallas_src>

<mosaic_0001>
module attributes {stable_mosaic.version = 11 : i64} {
  func.func @_fc1_stats_kernel(%arg0: i32, %arg1: memref<128x16xbf16, #tpu.memory_space<vmem>>, %arg2: memref<16x512xbf16, #tpu.memory_space<vmem>>, %arg3: memref<128x512xf32, #tpu.memory_space<vmem>>, %arg4: memref<1x1x512xf32, #tpu.memory_space<vmem>>, %arg5: memref<1x1x512xf32, #tpu.memory_space<vmem>>) attributes {dimension_semantics = [#tpu.dimension_semantics<parallel>], iteration_bounds = array<i64: 2>, scalar_prefetch = 0 : i64, scratch_operands = 0 : i64, tpu.core_type = #tpu.core_type<tc>, window_params = [{transform_indices = @transform_0, window_bounds = array<i64: 128, 16>}, {pipeline_mode = #tpu.pipeline_mode<synchronous>, transform_indices = @transform_1, window_bounds = array<i64: 16, 512>}, {transform_indices = @transform_2, window_bounds = array<i64: 128, 512>}, {transform_indices = @transform_3, window_bounds = array<i64: 1, 1, 512>}, {transform_indices = @transform_4, window_bounds = array<i64: 1, 1, 512>}]} {
    %c0 = arith.constant 0 : index
    %c0_0 = arith.constant 0 : index
    %0 = vector.load %arg1[%c0, %c0_0] : memref<128x16xbf16, #tpu.memory_space<vmem>>, vector<128x16xbf16>
    %c0_1 = arith.constant 0 : index
    %c0_2 = arith.constant 0 : index
    %1 = vector.load %arg2[%c0_1, %c0_2] : memref<16x512xbf16, #tpu.memory_space<vmem>>, vector<16x512xbf16>
    %cst = arith.constant dense<0.000000e+00> : vector<128x512xf32>
    %2 = tpu.matmul %0, %1, %cst {dimension_numbers = #tpu.dot_dimension_numbers<[1], [0], [0], [1], [0, 0, 1, 1], [], []>} : vector<128x16xbf16>, vector<16x512xbf16>, vector<128x512xf32> -> vector<128x512xf32>
    %c0_3 = arith.constant 0 : index
    %c0_4 = arith.constant 0 : index
    %3 = vector.load %arg3[%c0_3, %c0_4] : memref<128x512xf32, #tpu.memory_space<vmem>>, vector<128x512xf32>
    tpu.vector_store %arg3[%c0_3, %c0_4], %2 {strides = array<i32>} : memref<128x512xf32, #tpu.memory_space<vmem>>, vector<128x512xf32>,
    %cst_5 = arith.constant dense<0.000000e+00> : vector<512xf32>
    %4 = vector.multi_reduction <add>, %2, %cst_5 [0] : vector<128x512xf32> to vector<512xf32>
    %5 = vector.shape_cast %4 : vector<512xf32> to vector<1x512xf32>
    %6 = vector.shape_cast %5 : vector<1x512xf32> to vector<1x1x512xf32>
    %c0_6 = arith.constant 0 : index
    %c0_7 = arith.constant 0 : index
    %c0_8 = arith.constant 0 : index
    %7 = vector.load %arg4[%c0_6, %c0_7, %c0_8] : memref<1x1x512xf32, #tpu.memory_space<vmem>>, vector<1x1x512xf32>
    tpu.vector_store %arg4[%c0_6, %c0_7, %c0_8], %6 {strides = array<i32>} : memref<1x1x512xf32, #tpu.memory_space<vmem>>, vector<1x1x512xf32>,
    %8 = arith.mulf %2, %2 : vector<128x512xf32>
    %cst_9 = arith.constant dense<0.000000e+00> : vector<512xf32>
    %9 = vector.multi_reduction <add>, %8, %cst_9 [0] : vector<128x512xf32> to vector<512xf32>
    %10 = vector.shape_cast %9 : vector<512xf32> to vector<1x512xf32>
    %11 = vector.shape_cast %10 : vector<1x512xf32> to vector<1x1x512xf32>
    %c0_10 = arith.constant 0 : index
    %c0_11 = arith.constant 0 : index
    %c0_12 = arith.constant 0 : index
    %12 = vector.load %arg5[%c0_10, %c0_11, %c0_12] : memref<1x1x512xf32, #tpu.memory_space<vmem>>, vector<1x1x512xf32>
    tpu.vector_store %arg5[%c0_10, %c0_11, %c0_12], %11 {strides = array<i32>} : memref<1x1x512xf32, #tpu.memory_space<vmem>>, vector<1x1x512xf32>,
    return
  }
  func.func @transform_0(%arg0: i32) -> (i32, i32) {
    %c0_i32 = arith.constant 0 : i32
    %c0_i32_0 = arith.constant 0 : i32
    return %arg0, %c0_i32 : i32, i32
  }
  func.func @transform_1(%arg0: i32) -> (i32, i32) {
    %c0_i32 = arith.constant 0 : i32
    %c0_i32_0 = arith.constant 0 : i32
    %c0_i32_1 = arith.constant 0 : i32
    return %c0_i32, %c0_i32_0 : i32, i32
  }
  func.func @transform_2(%arg0: i32) -> (i32, i32) {
    %c0_i32 = arith.constant 0 : i32
    %c0_i32_0 = arith.constant 0 : i32
    return %arg0, %c0_i32 : i32, i32
  }
  func.func @transform_3(%arg0: i32) -> (i32, i32, i32) {
    %c0_i32 = arith.constant 0 : i32
    %c0_i32_0 = arith.constant 0 : i32
    %c0_i32_1 = arith.constant 0 : i32
    return %arg0, %c0_i32, %c0_i32_0 : i32, i32, i32
  }
  func.func @transform_4(%arg0: i32) -> (i32, i32, i32) {
    %c0_i32 = arith.constant 0 : i32
    %c0_i32_0 = arith.constant 0 : i32
    %c0_i32_1 = arith.constant 0 : i32
    return %arg0, %c0_i32, %c0_i32_0 : i32, i32, i32
  }
}

</mosaic_0001>

<llo_original>
// kernel: tpu_custom_call.1
$region0: #{tpu_custom_call.1}
  #allocation0 [shape = 'u32[]', space=smem, size = 0x4, offset = 0x4, fixed_abs, tag = 'smem constant byte address 0x4 - core index']
  #allocation1 [shape = 'u32[144,128]{1,0:T(1,128)}', space=vmem, size = 0x12000, scoped, tag = 'internal scratch']
  %s0 = inlined_call_operand.vmem [shape: bf16[256,16], index: 0, kind: input, shape index: {}]
  %s1 = inlined_call_operand.vmem [shape: bf16[16,512], index: 1, kind: input, shape index: {}]
  %s2 = inlined_call_operand.hbm [shape: f32[256,512], index: 2, kind: output, shape index: {0}]
  %s3 = inlined_call_operand.hbm [shape: f32[2,1,512], index: 3, kind: output, shape index: {1}]
  %s4 = inlined_call_operand.hbm [shape: f32[2,1,512], index: 4, kind: output, shape index: {2}]
  %5 = xla_tuple %s2, %s3, %s4
  %s6 = sld [smem:[#allocation0]]
  $region57: #{tpu_custom_call.1} parent=0
    _
  %s8 = ssub.s32 1, %s6
  %s9 = scalar_select 0, %s8, %s6
  $region1: #{tpu_custom_call.1} parent=0
    #allocation2 [shape = 'u8[524288]{0}', space=vmem, size = 0x80000, scoped, tag = 'output window, operand 0']
    #allocation3 [shape = 's32[2]{0}', space=sflag, size = 0x8, scoped, tag = 'scoped memory for tpu_custom_call.1']
    #allocation4 [shape = 'u8[4096]{0}', space=vmem, size = 0x1000, scoped, tag = 'output window, operand 1']
    #allocation5 [shape = 's32[2]{0}', space=sflag, size = 0x8, scoped, tag = 'scoped memory for tpu_custom_call.1']
    #allocation6 [shape = 'u8[4096]{0}', space=vmem, size = 0x1000, scoped, tag = 'output window, operand 2']
    %10 = vsyncpa [#allocation3], 0
    %s11 = scalar_lea.sflag [#allocation3], 1
    %12 = vsyncpa %s11, 0
    %13 = vsyncpa [#allocation5], 0
    %s14 = scalar_lea.sflag [#allocation5], 1
    %15 = vsyncpa %s14, 0
    loop: start=0, step=1, limit=4
    $region2: #{tpu_custom_call.1} parent=1 // loop_pre_header
      _
    $region3: #{tpu_custom_call.1} parent=1 // loop_header
      %s17 = sphi 0, %s21
      %p18 = scmp.ge.s32.totalorder %s17, 4
      %s27 = sphi 0, %s29
      %s30 = sphi 0, %s27
      %s31 = sphi 0, %s30
      %s47 = sphi 0, %s31
      %s51 = sphi 0, %s51
      %s53 = sphi 0, %s51
      %s54 = sphi 0, %s53
      %s68 = sphi 0, %s54
      %s74 = sphi 0, %s76
      %s77 = sphi 0, %s74
      %s78 = sphi 0, %s77
      %s94 = sphi 0, %s78
      %s100 = sphi 0, %s102
      %s103 = sphi 0, %s100
      %s104 = sphi 0, %s103
      %s120 = sphi 0, %s104
      %s126 = sphi 0, %s128
      %s129 = sphi 0, %s126
      %s130 = sphi 0, %s129
      %s146 = sphi 0, %s130
    $region4: #{tpu_custom_call.1} parent=1 // loop_header_branch
      %20 = sbr.rel (%p18) target = $region8
    $region5: #{tpu_custom_call.1} parent=1 // loop_body
      %s22 = ssub.s32 %s17, 1
      %s23 = ssub.s32 %s17, 2
      %s24 = sadd.s32 %s17, 1
      %s25 = ssub.s32 %s17, %s24
      %p26 = scmp.eq.s32.totalorder %s25, 0
      %s28 = sadd.s32 %s27, 1
      %s29 = scalar_select %p26, %s27, %s28
      %p32 = pneg %p26
      %p33 = scmp.eq.s32.totalorder %s17, 1
      %p34 = por %p32, %p33
      %p35 = scmp.ne.s32.totalorder %s27, %s30
      %p36 = scmp.eq.s32.totalorder %s17, 0
      %p37 = por %p35, %p36
      %p38 = scmp.ne.s32.totalorder %s27, %s30
      %p39 = scmp.eq.s32.totalorder %s22, 1
      %p40 = por %p38, %p39
      %p41 = scmp.ne.s32.totalorder %s30, %s31
      %p42 = scmp.eq.s32.totalorder %s22, 0
      %p43 = por %p41, %p42
      %p44 = scmp.ne.s32.totalorder %s30, %s31
      %p45 = scmp.eq.s32.totalorder %s23, 1
      %p46 = por %p44, %p45
      %p48 = scmp.ne.s32.totalorder %s31, %s47
      %p49 = scmp.eq.s32.totalorder %s23, 0
      %p50 = por %p48, %p49
      %s52 = sadd.s32 %s51, 1
      %p55 = scmp.eq.s32.totalorder %s17, 1
      %p56 = scmp.ne.s32.totalorder %s51, %s53
      %p57 = scmp.eq.s32.totalorder %s17, 0
      %p58 = por %p56, %p57
      %p59 = scmp.ne.s32.totalorder %s51, %s53
      %p60 = scmp.eq.s32.totalorder %s22, 1
      %p61 = por %p59, %p60
      %p62 = scmp.ne.s32.totalorder %s53, %s54
      %p63 = scmp.eq.s32.totalorder %s22, 0
      %p64 = por %p62, %p63
      %p65 = scmp.ne.s32.totalorder %s53, %s54
      %p66 = scmp.eq.s32.totalorder %s23, 1
      %p67 = por %p65, %p66
      %p69 = scmp.ne.s32.totalorder %s54, %s68
      %p70 = scmp.eq.s32.totalorder %s23, 0
      %p71 = por %p69, %p70
      %s72 = ssub.s32 %s17, %s24
      %p73 = scmp.eq.s32.totalorder %s72, 0
      %s75 = sadd.s32 %s74, 1
      %s76 = scalar_select %p73, %s74, %s75
      %p79 = pneg %p73
      %p80 = scmp.eq.s32.totalorder %s17, 1
      %p81 = por %p79, %p80
      %p82 = scmp.ne.s32.totalorder %s74, %s77
      %p83 = scmp.eq.s32.totalorder %s17, 0
      %p84 = por %p82, %p83
      %p85 = scmp.ne.s32.totalorder %s74, %s77
      %p86 = scmp.eq.s32.totalorder %s22, 1
      %p87 = por %p85, %p86
      %p88 = scmp.ne.s32.totalorder %s77, %s78
      %p89 = scmp.eq.s32.totalorder %s22, 0
      %p90 = por %p88, %p89
      %p91 = scmp.ne.s32.totalorder %s77, %s78
      %p92 = scmp.eq.s32.totalorder %s23, 1
      %p93 = por %p91, %p92
      %p95 = scmp.ne.s32.totalorder %s78, %s94
      %p96 = scmp.eq.s32.totalorder %s23, 0
      %p97 = por %p95, %p96
      %s98 = ssub.s32 %s17, %s24
      %p99 = scmp.eq.s32.totalorder %s98, 0
      %s101 = sadd.s32 %s100, 1
      %s102 = scalar_select %p99, %s100, %s101
      %p105 = pneg %p99
      %p106 = scmp.eq.s32.totalorder %s17, 1
      %p107 = por %p105, %p106
      %p108 = scmp.ne.s32.totalorder %s100, %s103
      %p109 = scmp.eq.s32.totalorder %s17, 0
      %p110 = por %p108, %p109
      %p111 = scmp.ne.s32.totalorder %s100, %s103
      %p112 = scmp.eq.s32.totalorder %s22, 1
      %p113 = por %p111, %p112
      %p114 = scmp.ne.s32.totalorder %s103, %s104
      %p115 = scmp.eq.s32.totalorder %s22, 0
      %p116 = por %p114, %p115
      %p117 = scmp.ne.s32.totalorder %s103, %s104
      %p118 = scmp.eq.s32.totalorder %s23, 1
      %p119 = por %p117, %p118
      %p121 = scmp.ne.s32.totalorder %s104, %s120
      %p122 = scmp.eq.s32.totalorder %s23, 0
      %p123 = por %p121, %p122
      %s124 = ssub.s32 %s17, %s24
      %p125 = scmp.eq.s32.totalorder %s124, 0
      %s127 = sadd.s32 %s126, 1
      %s128 = scalar_select %p125, %s126, %s127
      %p131 = pneg %p125
      %p132 = scmp.eq.s32.totalorder %s17, 1
      %p133 = por %p131, %p132
      %p134 = scmp.ne.s32.totalorder %s126, %s129
      %p135 = scmp.eq.s32.totalorder %s17, 0
      %p136 = por %p134, %p135
      %p137 = scmp.ne.s32.totalorder %s126, %s129
      %p138 = scmp.eq.s32.totalorder %s22, 1
      %p139 = por %p137, %p138
      %p140 = scmp.ne.s32.totalorder %s129, %s130
      %p141 = scmp.eq.s32.totalorder %s22, 0
      %p142 = por %p140, %p141
      %p143 = scmp.ne.s32.totalorder %s129, %s130
      %p144 = scmp.eq.s32.totalorder %s23, 1
      %p145 = por %p143, %p144
      %p147 = scmp.ne.s32.totalorder %s130, %s146
      %p148 = scmp.eq.s32.totalorder %s23, 0
      %p149 = por %p147, %p148
      %p150 = scmp.le.s32.totalorder 1, %s17
      %p151 = scmp.lt.s32.totalorder %s17, 3
      %p152 = pnand %p150, %p151
      %p153 = pneg %p152
      // Predicated region
      $region9: #{tpu_custom_call.1} parent=5 // pred_check
        _
      $region10: #{tpu_custom_call.1} parent=5 // pred_check_branch
        %155 = sbr.rel (%p152) target = $region12
      $region11: #{tpu_custom_call.1} parent=5 // pred_region
        %s156 = ssub.s32 %s17, 1
        // Predicated region
        $region13: #{tpu_custom_call.1} parent=11 // pred_check
          %p157 = pneg %p64
        $region14: #{tpu_custom_call.1} parent=11 // pred_check_branch
          %159 = sbr.rel (%p157) target = $region16
        $region15: #{tpu_custom_call.1} parent=11 // pred_region
          _
        $region16: #{tpu_custom_call.1} parent=11 // pred_fallthru
          _
      $region12: #{tpu_custom_call.1} parent=5 // pred_fallthru
        _
      %p160 = scmp.lt.s32.totalorder %s17, 2
      // Predicated region
      $region17: #{tpu_custom_call.1} parent=5 // pred_check
        %p161 = pneg %p160
      $region18: #{tpu_custom_call.1} parent=5 // pred_check_branch
        %163 = sbr.rel (%p161) target = $region20
      $region19: #{tpu_custom_call.1} parent=5 // pred_region
        // Predicated region
        $region21: #{tpu_custom_call.1} parent=19 // pred_check
          %p164 = pneg %p37
        $region22: #{tpu_custom_call.1} parent=19 // pred_check_branch
          %166 = sbr.rel (%p164) target = $region24
        $region23: #{tpu_custom_call.1} parent=19 // pred_region
          %s167 = smul.u32 16, %s17
          %p168 = scmp.lt.s32.totalorder %s167, 31
          %s169 = scalar_select %p168, %s167, 31
          %s170 = smul.addr %s169, 4
          %s171 = scalar_lea.vmem %s0, %s170
          %s172 = smul.u32 16, %s17
        $region24: #{tpu_custom_call.1} parent=19 // pred_fallthru
          _
      $region20: #{tpu_custom_call.1} parent=5 // pred_fallthru
        _
      %p173 = scmp.le.s32.totalorder 1, %s17
      %p174 = scmp.lt.s32.totalorder %s17, 3
      %p175 = pnand %p173, %p174
      %p176 = pneg %p175
      // Predicated region
      $region25: #{tpu_custom_call.1} parent=5 // pred_check
        _
      $region26: #{tpu_custom_call.1} parent=5 // pred_check_branch
        %178 = sbr.rel (%p175) target = $region28
      $region27: #{tpu_custom_call.1} parent=5 // pred_region
        %s179 = ssub.s32 %s17, 1
        %s180 = smul.u32 16, %s22
        %p181 = scmp.lt.s32.totalorder %s180, 31
        %s182 = scalar_select %p181, %s180, 31
        %s183 = smul.addr %s182, 4
        %s184 = scalar_lea.vmem %s0, %s183
        %p185 = pneg %p43
        %p186 = pneg %p40
        %p187 = pneg %p64
        %p188 = pneg %p61
        %p189 = pneg %p90
        %p190 = pneg %p87
        %s191 = sand.u32 %s77, 1
        %s192 = scalar_lea.sflag [#allocation3], %s191
        %s193 = sand.u32 %s77, 1
        %s194 = smul.addr %s193, 512
        %s195 = scalar_lea.vmem [#allocation2], %s194
        %p196 = pneg %p116
        %p197 = pneg %p113
        %s198 = sand.u32 %s22, 1
        %s199 = scalar_lea.sflag [#allocation5], %s198
        %s200 = sand.u32 %s103, 1
        %s201 = smul.addr %s200, 4
        %s202 = scalar_lea.vmem [#allocation4], %s201
        %p203 = pneg %p142
        %p204 = pneg %p139
        %s205 = sand.u32 %s22, 1
        %s206 = scalar_lea.sflag [#allocation5], %s205
        %s207 = sand.u32 %s129, 1
        %s208 = smul.addr %s207, 4
        %s209 = scalar_lea.vmem [#allocation6], %s208
        %s210 = smul.u32 16, %s22
        %p211 = scmp.lt.s32.totalorder %s210, 31
        %s212 = scalar_select %p211, %s210, 31
        %s213 = smul.addr %s212, 4
        %s214 = scalar_lea.vmem %s0, %s213
        %s215 = smul.u32 16, %s22
        %s216 = smul.u32 16, %s22
        %v218 = vld [vmem:[%s214] sm:$0xf]
        %v219 = vld [vmem:[%s214 + $0x4] sm:$0xf]
        %v220 = vld [vmem:[%s214 + $0x8] sm:$0xf]
        %v221 = vld [vmem:[%s214 + $0xc] sm:$0xf]
        %v222 = vld [vmem:[%s214 + $0x10] sm:$0xf]
        %v223 = vld [vmem:[%s214 + $0x14] sm:$0xf]
        %v224 = vld [vmem:[%s214 + $0x18] sm:$0xf]
        %v225 = vld [vmem:[%s214 + $0x1c] sm:$0xf]
        %v226 = vld [vmem:[%s214 + $0x20] sm:$0xf]
        %v227 = vld [vmem:[%s214 + $0x24] sm:$0xf]
        %v228 = vld [vmem:[%s214 + $0x28] sm:$0xf]
        %v229 = vld [vmem:[%s214 + $0x2c] sm:$0xf]
        %v230 = vld [vmem:[%s214 + $0x30] sm:$0xf]
        %v231 = vld [vmem:[%s214 + $0x34] sm:$0xf]
        %v232 = vld [vmem:[%s214 + $0x38] sm:$0xf]
        %v233 = vld [vmem:[%s214 + $0x3c] sm:$0xf]
        %v234 = vld [vmem:[%s1] sm:$0xff]
        %v235 = vld [vmem:[%s1 + $0x8] sm:$0xff]
        %v236 = vld [vmem:[%s1 + $0x10] sm:$0xff]
        %v237 = vld [vmem:[%s1 + $0x18] sm:$0xff]
        %v254 = vunpack.c.l.b16 %v218
        %v255 = vunpack.c.l.b16 %v219
        %v256 = vunpack.c.l.b16 %v220
        %v257 = vunpack.c.l.b16 %v221
        %v258 = vunpack.c.l.b16 %v222
        %v259 = vunpack.c.l.b16 %v223
        %v260 = vunpack.c.l.b16 %v224
        %v261 = vunpack.c.l.b16 %v225
        %v262 = vunpack.c.l.b16 %v226
        %v263 = vunpack.c.l.b16 %v227
        %v264 = vunpack.c.l.b16 %v228
        %v265 = vunpack.c.l.b16 %v229
        %v266 = vunpack.c.l.b16 %v230
        %v267 = vunpack.c.l.b16 %v231
        %v268 = vunpack.c.l.b16 %v232
        %v269 = vunpack.c.l.b16 %v233
        %v270 = vpack.c.b16 %v255, %v254
        %v271 = vpack.c.b16 %v257, %v256
        %v272 = vpack.c.b16 %v259, %v258
        %v273 = vpack.c.b16 %v261, %v260
        %v274 = vpack.c.b16 %v263, %v262
        %v275 = vpack.c.b16 %v265, %v264
        %v276 = vpack.c.b16 %v267, %v266
        %v277 = vpack.c.b16 %v269, %v268
        %v282 = vunpack.c.l.b16 %v234
        %v283 = vunpack.c.h.b16 %v234
        %v284 = vunpack.c.l.b16 %v235
        %v285 = vunpack.c.h.b16 %v235
        %v286 = vunpack.c.l.b16 %v236
        %v287 = vunpack.c.h.b16 %v236
        %v288 = vunpack.c.l.b16 %v237
        %v289 = vunpack.c.h.b16 %v237
        %v290 = vpack.c.b16 %v286, %v282
        %v291 = vpack.c.b16 %v287, %v283
        %v292 = vpack.c.b16 %v288, %v284
        %v293 = vpack.c.b16 %v289, %v285
        %vm298 = vcmask 130048
        %v300 = vsel %vm298, %v270, 0
        %v303 = vsel %vm298, %v271, 0
        %v306 = vsel %vm298, %v272, 0
        %v309 = vsel %vm298, %v273, 0
        %v312 = vsel %vm298, %v274, 0
        %v315 = vsel %vm298, %v275, 0
        %v318 = vsel %vm298, %v276, 0
        %v321 = vsel %vm298, %v277, 0
        %323 = vmatprep.subr.bf16.mxu0 0
        %324 = vmatpush1.bf16.msra.mxu0 0
        %325 = vmatprep.subr.bf16.mxu0 0
        %326 = vmatpush1.bf16.msra.mxu0 0
        %327 = vmatprep.subr.bf16.mxu0 0
        %328 = vmatpush1.bf16.msra.mxu0 0
        %329 = vmatprep.subr.bf16.mxu0 0
        %330 = vmatpush1.bf16.msra.mxu0 0
        %331 = vmatprep.subr.bf16.mxu0 0
        %332 = vmatpush1.bf16.msra.mxu0 0
        %333 = vmatprep.subr.bf16.mxu0 0
        %334 = vmatpush1.bf16.msra.mxu0 0
        %335 = vmatprep.subr.bf16.mxu0 0
        %336 = vmatpush1.bf16.msra.mxu0 0
        %337 = vmatprep.subr.bf16.mxu0 %v291
        %338 = vmatpush1.bf16.msra.mxu0 %v290
        %339 = vmatprep.subr.bf16.mxu0 0
        %340 = vmatpush2.bf16.msra.mxu0 0
        %341 = vmatprep.subr.bf16.mxu0 0
        %342 = vmatpush2.bf16.msra.mxu0 0
        %343 = vmatprep.subr.bf16.mxu0 0
        %344 = vmatpush2.bf16.msra.mxu0 0
        %345 = vmatprep.subr.bf16.mxu0 0
        %346 = vmatpush2.bf16.msra.mxu0 0
        %347 = vmatprep.subr.bf16.mxu0 0
        %348 = vmatpush2.bf16.msra.mxu0 0
        %349 = vmatprep.subr.bf16.mxu0 0
        %350 = vmatpush2.bf16.msra.mxu0 0
        %351 = vmatprep.subr.bf16.mxu0 0
        %352 = vmatpush2.bf16.msra.mxu0 0
        %353 = vmatprep.subr.bf16.mxu0 0
        %354 = vmatpush2.bf16.msra.mxu0 0
        %355 = vmatprep.mubr.bf16.mxu0 0
        %356 = vmatmul.mubr.bf16.gmra.mxu0 %v300
        %v357 = vpop.f32.mrf.mxu0
        %v358 = vadd.f32 0.0, %v357
        %v359 = vpop.f32.mrf.mxu0
        %v360 = vadd.f32 0.0, %v359
        %v361 = vpop.f32.mrf.mxu0
        %v362 = vadd.f32 0.0, %v361
        %v363 = vpop.f32.mrf.mxu0
        %v364 = vadd.f32 0.0, %v363
        %365 = vmatprep.mubr.bf16.mxu0 0
        %366 = vmatmul.mubr.bf16.gmra.mxu0 %v303
        %v367 = vpop.f32.mrf.mxu0
        %v368 = vadd.f32 0.0, %v367
        %v369 = vpop.f32.mrf.mxu0
        %v370 = vadd.f32 0.0, %v369
        %v371 = vpop.f32.mrf.mxu0
        %v372 = vadd.f32 0.0, %v371
        %v373 = vpop.f32.mrf.mxu0
        %v374 = vadd.f32 0.0, %v373
        %375 = vmatprep.mubr.bf16.mxu0 0
        %376 = vmatmul.mubr.bf16.gmra.mxu0 %v306
        %v377 = vpop.f32.mrf.mxu0
        %v378 = vadd.f32 0.0, %v377
        %v379 = vpop.f32.mrf.mxu0
        %v380 = vadd.f32 0.0, %v379
        %v381 = vpop.f32.mrf.mxu0
        %v382 = vadd.f32 0.0, %v381
        %v383 = vpop.f32.mrf.mxu0
        %v384 = vadd.f32 0.0, %v383
        %385 = vmatprep.mubr.bf16.mxu0 0
        %386 = vmatmul.mubr.bf16.gmra.mxu0 %v309
        %v387 = vpop.f32.mrf.mxu0
        %v388 = vadd.f32 0.0, %v387
        %v389 = vpop.f32.mrf.mxu0
        %v390 = vadd.f32 0.0, %v389
        %v391 = vpop.f32.mrf.mxu0
        %v392 = vadd.f32 0.0, %v391
        %v393 = vpop.f32.mrf.mxu0
        %v394 = vadd.f32 0.0, %v393
        %395 = vmatprep.mubr.bf16.mxu0 0
        %396 = vmatmul.mubr.bf16.gmra.mxu0 %v312
        %v397 = vpop.f32.mrf.mxu0
        %v398 = vadd.f32 0.0, %v397
        %v399 = vpop.f32.mrf.mxu0
        %v400 = vadd.f32 0.0, %v399
        %v401 = vpop.f32.mrf.mxu0
        %v402 = vadd.f32 0.0, %v401
        %v403 = vpop.f32.mrf.mxu0
        %v404 = vadd.f32 0.0, %v403
        %405 = vmatprep.mubr.bf16.mxu0 0
        %406 = vmatmul.mubr.bf16.gmra.mxu0 %v315
        %v407 = vpop.f32.mrf.mxu0
        %v408 = vadd.f32 0.0, %v407
        %v409 = vpop.f32.mrf.mxu0
        %v410 = vadd.f32 0.0, %v409
        %v411 = vpop.f32.mrf.mxu0
        %v412 = vadd.f32 0.0, %v411
        %v413 = vpop.f32.mrf.mxu0
        %v414 = vadd.f32 0.0, %v413
        %415 = vmatprep.mubr.bf16.mxu0 0
        %416 = vmatmul.mubr.bf16.gmra.mxu0 %v318
        %v417 = vpop.f32.mrf.mxu0
        %v418 = vadd.f32 0.0, %v417
        %v419 = vpop.f32.mrf.mxu0
        %v420 = vadd.f32 0.0, %v419
        %v421 = vpop.f32.mrf.mxu0
        %v422 = vadd.f32 0.0, %v421
        %v423 = vpop.f32.mrf.mxu0
        %v424 = vadd.f32 0.0, %v423
        %425 = vmatprep.mubr.bf16.mxu0 0
        %426 = vmatmul.mubr.bf16.gmra.mxu0 %v321
        %v427 = vpop.f32.mrf.mxu0
        %v428 = vadd.f32 0.0, %v427
        %v429 = vpop.f32.mrf.mxu0
        %v430 = vadd.f32 0.0, %v429
        %v431 = vpop.f32.mrf.mxu0
        %v432 = vadd.f32 0.0, %v431
        %v433 = vpop.f32.mrf.mxu0
        %v434 = vadd.f32 0.0, %v433
        %435 = vdwg.mxu0
        %436 = vmatprep.subr.bf16.mxu0 0
        %437 = vmatpush1.bf16.msra.mxu0 0
        %438 = vmatprep.subr.bf16.mxu0 0
        %439 = vmatpush1.bf16.msra.mxu0 0
        %440 = vmatprep.subr.bf16.mxu0 0
        %441 = vmatpush1.bf16.msra.mxu0 0
        %442 = vmatprep.subr.bf16.mxu0 0
        %443 = vmatpush1.bf16.msra.mxu0 0
        %444 = vmatprep.subr.bf16.mxu0 0
        %445 = vmatpush1.bf16.msra.mxu0 0
        %446 = vmatprep.subr.bf16.mxu0 0
        %447 = vmatpush1.bf16.msra.mxu0 0
        %448 = vmatprep.subr.bf16.mxu0 0
        %449 = vmatpush1.bf16.msra.mxu0 0
        %450 = vmatprep.subr.bf16.mxu0 %v293
        %451 = vmatpush1.bf16.msra.mxu0 %v292
        %452 = vmatprep.subr.bf16.mxu0 0
        %453 = vmatpush2.bf16.msra.mxu0 0
        %454 = vmatprep.subr.bf16.mxu0 0
        %455 = vmatpush2.bf16.msra.mxu0 0
        %456 = vmatprep.subr.bf16.mxu0 0
        %457 = vmatpush2.bf16.msra.mxu0 0
        %458 = vmatprep.subr.bf16.mxu0 0
        %459 = vmatpush2.bf16.msra.mxu0 0
        %460 = vmatprep.subr.bf16.mxu0 0
        %461 = vmatpush2.bf16.msra.mxu0 0
        %462 = vmatprep.subr.bf16.mxu0 0
        %463 = vmatpush2.bf16.msra.mxu0 0
        %464 = vmatprep.subr.bf16.mxu0 0
        %465 = vmatpush2.bf16.msra.mxu0 0
        %466 = vmatprep.subr.bf16.mxu0 0
        %467 = vmatpush2.bf16.msra.mxu0 0
        %468 = vmatprep.mubr.bf16.mxu0 0
        %469 = vmatmul.mubr.bf16.gmra.mxu0 %v300
        %v470 = vpop.f32.mrf.mxu0
        %v471 = vadd.f32 0.0, %v470
        %v472 = vpop.f32.mrf.mxu0
        %v473 = vadd.f32 0.0, %v472
        %v474 = vpop.f32.mrf.mxu0
        %v475 = vadd.f32 0.0, %v474
        %v476 = vpop.f32.mrf.mxu0
        %v477 = vadd.f32 0.0, %v476
        %478 = vmatprep.mubr.bf16.mxu0 0
        %479 = vmatmul.mubr.bf16.gmra.mxu0 %v303
        %v480 = vpop.f32.mrf.mxu0
        %v481 = vadd.f32 0.0, %v480
        %v482 = vpop.f32.mrf.mxu0
        %v483 = vadd.f32 0.0, %v482
        %v484 = vpop.f32.mrf.mxu0
        %v485 = vadd.f32 0.0, %v484
        %v486 = vpop.f32.mrf.mxu0
        %v487 = vadd.f32 0.0, %v486
        %488 = vmatprep.mubr.bf16.mxu0 0
        %489 = vmatmul.mubr.bf16.gmra.mxu0 %v306
        %v490 = vpop.f32.mrf.mxu0
        %v491 = vadd.f32 0.0, %v490
        %v492 = vpop.f32.mrf.mxu0
        %v493 = vadd.f32 0.0, %v492
        %v494 = vpop.f32.mrf.mxu0
        %v495 = vadd.f32 0.0, %v494
        %v496 = vpop.f32.mrf.mxu0
        %v497 = vadd.f32 0.0, %v496
        %498 = vmatprep.mubr.bf16.mxu0 0
        %499 = vmatmul.mubr.bf16.gmra.mxu0 %v309
        %v500 = vpop.f32.mrf.mxu0
        %v501 = vadd.f32 0.0, %v500
        %v502 = vpop.f32.mrf.mxu0
        %v503 = vadd.f32 0.0, %v502
        %v504 = vpop.f32.mrf.mxu0
        %v505 = vadd.f32 0.0, %v504
        %v506 = vpop.f32.mrf.mxu0
        %v507 = vadd.f32 0.0, %v506
        %508 = vmatprep.mubr.bf16.mxu0 0
        %509 = vmatmul.mubr.bf16.gmra.mxu0 %v312
        %v510 = vpop.f32.mrf.mxu0
        %v511 = vadd.f32 0.0, %v510
        %v512 = vpop.f32.mrf.mxu0
        %v513 = vadd.f32 0.0, %v512
        %v514 = vpop.f32.mrf.mxu0
        %v515 = vadd.f32 0.0, %v514
        %v516 = vpop.f32.mrf.mxu0
        %v517 = vadd.f32 0.0, %v516
        %518 = vmatprep.mubr.bf16.mxu0 0
        %519 = vmatmul.mubr.bf16.gmra.mxu0 %v315
        %v520 = vpop.f32.mrf.mxu0
        %v521 = vadd.f32 0.0, %v520
        %v522 = vpop.f32.mrf.mxu0
        %v523 = vadd.f32 0.0, %v522
        %v524 = vpop.f32.mrf.mxu0
        %v525 = vadd.f32 0.0, %v524
        %v526 = vpop.f32.mrf.mxu0
        %v527 = vadd.f32 0.0, %v526
        %528 = vmatprep.mubr.bf16.mxu0 0
        %529 = vmatmul.mubr.bf16.gmra.mxu0 %v318
        %v530 = vpop.f32.mrf.mxu0
        %v531 = vadd.f32 0.0, %v530
        %v532 = vpop.f32.mrf.mxu0
        %v533 = vadd.f32 0.0, %v532
        %v534 = vpop.f32.mrf.mxu0
        %v535 = vadd.f32 0.0, %v534
        %v536 = vpop.f32.mrf.mxu0
        %v537 = vadd.f32 0.0, %v536
        %538 = vmatprep.mubr.bf16.mxu0 0
        %539 = vmatmul.mubr.bf16.gmra.mxu0 %v321
        %v540 = vpop.f32.mrf.mxu0
        %v541 = vadd.f32 0.0, %v540
        %v542 = vpop.f32.mrf.mxu0
        %v543 = vadd.f32 0.0, %v542
        %v544 = vpop.f32.mrf.mxu0
        %v545 = vadd.f32 0.0, %v544
        %v546 = vpop.f32.mrf.mxu0
        %v547 = vadd.f32 0.0, %v546
        %548 = vdwg.mxu0
        %549 = vst [vmem:[%s195] sm:$0xff] %v358
        %550 = vst [vmem:[%s195 + $0x8] sm:$0xff] %v360
        %551 = vst [vmem:[%s195 + $0x10] sm:$0xff] %v471
        %552 = vst [vmem:[%s195 + $0x18] sm:$0xff] %v473
        %553 = vst [vmem:[%s195 + $0x20] sm:$0xff] %v362
        %554 = vst [vmem:[%s195 + $0x28] sm:$0xff] %v364
        %555 = vst [vmem:[%s195 + $0x30] sm:$0xff] %v475
        %556 = vst [vmem:[%s195 + $0x38] sm:$0xff] %v477
        %557 = vst [vmem:[%s195 + $0x40] sm:$0xff] %v368
        %558 = vst [vmem:[%s195 + $0x48] sm:$0xff] %v370
        %559 = vst [vmem:[%s195 + $0x50] sm:$0xff] %v481
        %560 = vst [vmem:[%s195 + $0x58] sm:$0xff] %v483
        %561 = vst [vmem:[%s195 + $0x60] sm:$0xff] %v372
        %562 = vst [vmem:[%s195 + $0x68] sm:$0xff] %v374
        %563 = vst [vmem:[%s195 + $0x70] sm:$0xff] %v485
        %564 = vst [vmem:[%s195 + $0x78] sm:$0xff] %v487
        %565 = vst [vmem:[%s195 + $0x80] sm:$0xff] %v378
        %566 = vst [vmem:[%s195 + $0x88] sm:$0xff] %v380
        %567 = vst [vmem:[%s195 + $0x90] sm:$0xff] %v491
        %568 = vst [vmem:[%s195 + $0x98] sm:$0xff] %v493
        %569 = vst [vmem:[%s195 + $0xa0] sm:$0xff] %v382
        %570 = vst [vmem:[%s195 + $0xa8] sm:$0xff] %v384
        %571 = vst [vmem:[%s195 + $0xb0] sm:$0xff] %v495
        %572 = vst [vmem:[%s195 + $0xb8] sm:$0xff] %v497
        %573 = vst [vmem:[%s195 + $0xc0] sm:$0xff] %v388
        %574 = vst [vmem:[%s195 + $0xc8] sm:$0xff] %v390
        %575 = vst [vmem:[%s195 + $0xd0] sm:$0xff] %v501
        %576 = vst [vmem:[%s195 + $0xd8] sm:$0xff] %v503
        %577 = vst [vmem:[%s195 + $0xe0] sm:$0xff] %v392
        %578 = vst [vmem:[%s195 + $0xe8] sm:$0xff] %v394
        %579 = vst [vmem:[%s195 + $0xf0] sm:$0xff] %v505
        %580 = vst [vmem:[%s195 + $0xf8] sm:$0xff] %v507
        %581 = vst [vmem:[%s195 + $0x100] sm:$0xff] %v398
        %582 = vst [vmem:[%s195 + $0x108] sm:$0xff] %v400
        %583 = vst [vmem:[%s195 + $0x110] sm:$0xff] %v511
        %584 = vst [vmem:[%s195 + $0x118] sm:$0xff] %v513
        %585 = vst [vmem:[%s195 + $0x120] sm:$0xff] %v402
        %586 = vst [vmem:[%s195 + $0x128] sm:$0xff] %v404
        %587 = vst [vmem:[%s195 + $0x130] sm:$0xff] %v515
        %588 = vst [vmem:[%s195 + $0x138] sm:$0xff] %v517
        %589 = vst [vmem:[%s195 + $0x140] sm:$0xff] %v408
        %590 = vst [vmem:[%s195 + $0x148] sm:$0xff] %v410
        %591 = vst [vmem:[%s195 + $0x150] sm:$0xff] %v521
        %592 = vst [vmem:[%s195 + $0x158] sm:$0xff] %v523
        %593 = vst [vmem:[%s195 + $0x160] sm:$0xff] %v412
        %594 = vst [vmem:[%s195 + $0x168] sm:$0xff] %v414
        %595 = vst [vmem:[%s195 + $0x170] sm:$0xff] %v525
        %596 = vst [vmem:[%s195 + $0x178] sm:$0xff] %v527
        %597 = vst [vmem:[%s195 + $0x180] sm:$0xff] %v418
        %598 = vst [vmem:[%s195 + $0x188] sm:$0xff] %v420
        %599 = vst [vmem:[%s195 + $0x190] sm:$0xff] %v531
        %600 = vst [vmem:[%s195 + $0x198] sm:$0xff] %v533
        %601 = vst [vmem:[%s195 + $0x1a0] sm:$0xff] %v422
        %602 = vst [vmem:[%s195 + $0x1a8] sm:$0xff] %v424
        %603 = vst [vmem:[%s195 + $0x1b0] sm:$0xff] %v535
        %604 = vst [vmem:[%s195 + $0x1b8] sm:$0xff] %v537
        %605 = vst [vmem:[%s195 + $0x1c0] sm:$0xff] %v428
        %606 = vst [vmem:[%s195 + $0x1c8] sm:$0xff] %v430
        %607 = vst [vmem:[%s195 + $0x1d0] sm:$0xff] %v541
        %608 = vst [vmem:[%s195 + $0x1d8] sm:$0xff] %v543
        %609 = vst [vmem:[%s195 + $0x1e0] sm:$0xff] %v432
        %610 = vst [vmem:[%s195 + $0x1e8] sm:$0xff] %v434
        %611 = vst [vmem:[%s195 + $0x1f0] sm:$0xff] %v545
        %612 = vst [vmem:[%s195 + $0x1f8] sm:$0xff] %v547
        %v613 = vadd.f32 %v358, %v362
        %v614 = vadd.f32 %v613, %v368
        %v615 = vadd.f32 %v614, %v372
        %v616 = vadd.f32 %v615, %v378
        %v617 = vadd.f32 %v616, %v382
        %v618 = vadd.f32 %v617, %v388
        %v619 = vadd.f32 %v618, %v392
        %v620 = vadd.f32 %v619, %v398
        %v621 = vadd.f32 %v620, %v402
        %v622 = vadd.f32 %v621, %v408
        %v623 = vadd.f32 %v622, %v412
        %v624 = vadd.f32 %v623, %v418
        %v625 = vadd.f32 %v624, %v422
        %v626 = vadd.f32 %v625, %v428
        %v627 = vadd.f32 %v626, %v432
        %v628 = vrot.slane %v627, 4
        %v629 = vadd.f32 %v627, %v628
        %v630 = vrot.slane %v629, 2
        %v631 = vadd.f32 %v629, %v630
        %v632 = vrot.slane %v631, 1
        %v633 = vadd.f32 %v631, %v632
        %v634 = vadd.f32 %v360, %v364
        %v635 = vadd.f32 %v634, %v370
        %v636 = vadd.f32 %v635, %v374
        %v637 = vadd.f32 %v636, %v380
        %v638 = vadd.f32 %v637, %v384
        %v639 = vadd.f32 %v638, %v390
        %v640 = vadd.f32 %v639, %v394
        %v641 = vadd.f32 %v640, %v400
        %v642 = vadd.f32 %v641, %v404
        %v643 = vadd.f32 %v642, %v410
        %v644 = vadd.f32 %v643, %v414
        %v645 = vadd.f32 %v644, %v420
        %v646 = vadd.f32 %v645, %v424
        %v647 = vadd.f32 %v646, %v430
        %v648 = vadd.f32 %v647, %v434
        %v649 = vrot.slane %v648, 4
        %v650 = vadd.f32 %v648, %v649
        %v651 = vrot.slane %v650, 2
        %v652 = vadd.f32 %v650, %v651
        %v653 = vrot.slane %v652, 1
        %v654 = vadd.f32 %v652, %v653
        %v655 = vadd.f32 %v471, %v475
        %v656 = vadd.f32 %v655, %v481
        %v657 = vadd.f32 %v656, %v485
        %v658 = vadd.f32 %v657, %v491
        %v659 = vadd.f32 %v658, %v495
        %v660 = vadd.f32 %v659, %v501
        %v661 = vadd.f32 %v660, %v505
        %v662 = vadd.f32 %v661, %v511
        %v663 = vadd.f32 %v662, %v515
        %v664 = vadd.f32 %v663, %v521
        %v665 = vadd.f32 %v664, %v525
        %v666 = vadd.f32 %v665, %v531
        %v667 = vadd.f32 %v666, %v535
        %v668 = vadd.f32 %v667, %v541
        %v669 = vadd.f32 %v668, %v545
        %v670 = vrot.slane %v669, 4
        %v671 = vadd.f32 %v669, %v670
        %v672 = vrot.slane %v671, 2
        %v673 = vadd.f32 %v671, %v672
        %v674 = vrot.slane %v673, 1
        %v675 = vadd.f32 %v673, %v674
        %v676 = vadd.f32 %v473, %v477
        %v677 = vadd.f32 %v676, %v483
        %v678 = vadd.f32 %v677, %v487
        %v679 = vadd.f32 %v678, %v493
        %v680 = vadd.f32 %v679, %v497
        %v681 = vadd.f32 %v680, %v503
        %v682 = vadd.f32 %v681, %v507
        %v683 = vadd.f32 %v682, %v513
        %v684 = vadd.f32 %v683, %v517
        %v685 = vadd.f32 %v684, %v523
        %v686 = vadd.f32 %v685, %v527
        %v687 = vadd.f32 %v686, %v533
        %v688 = vadd.f32 %v687, %v537
        %v689 = vadd.f32 %v688, %v543
        %v690 = vadd.f32 %v689, %v547
        %v691 = vrot.slane %v690, 4
        %v692 = vadd.f32 %v690, %v691
        %v693 = vrot.slane %v692, 2
        %v694 = vadd.f32 %v692, %v693
        %v695 = vrot.slane %v694, 1
        %v696 = vadd.f32 %v694, %v695
        %v701 = vcombine.low %v633, %v654
        %v702 = vcombine.low %v675, %v696
        %v704 = vunpack.c.l.s4 1966171168
        %v705 = vunpack.c.0.s8 %v704
        %v706 = vlaneseq
        %v707 = vshrl.u32 %v706, 7
        %v708 = vsub.s32 %v705, %v707
        %v709 = vrot.slane %v701, %v708
        %v711 = vunpack.c.l.s4 1966171168
        %v712 = vunpack.c.0.s8 %v711
        %v713 = vlaneseq
        %v714 = vshrl.u32 %v713, 7
        %v715 = vsub.s32 %v712, %v714
        %v716 = vrot.slane %v702, %v715
        %v717 = vcombine.low %v709, %v716
        %v719 = vunpack.c.l.s4 1966171168
        %v720 = vunpack.c.0.s8 %v719
        %v721 = vlaneseq
        %v722 = vshrl.u32 %v721, 7
        %v723 = vsub.s32 %v720, %v722
        %v724 = vrot.slane %v717, %v723
        %v726 = vlaneseq
        %vm727 = vcmp.ge.s32.totalorder %v726, 0
        %vm728 = vcmp.lt.s32.totalorder %v726, 512
        %vm729 = vmand %vm727, %vm728
        %730 = vst.msk [vmem:[%s202] sm:$0xf] %vm729, %v724
        %v731 = vmul.f32 %v358, %v358
        %v732 = vmul.f32 %v360, %v360
        %v733 = vmul.f32 %v471, %v471
        %v734 = vmul.f32 %v473, %v473
        %v735 = vmul.f32 %v362, %v362
        %v736 = vmul.f32 %v364, %v364
        %v737 = vmul.f32 %v475, %v475
        %v738 = vmul.f32 %v477, %v477
        %v739 = vmul.f32 %v368, %v368
        %v740 = vmul.f32 %v370, %v370
        %v741 = vmul.f32 %v481, %v481
        %v742 = vmul.f32 %v483, %v483
        %v743 = vmul.f32 %v372, %v372
        %v744 = vmul.f32 %v374, %v374
        %v745 = vmul.f32 %v485, %v485
        %v746 = vmul.f32 %v487, %v487
        %v747 = vmul.f32 %v378, %v378
        %v748 = vmul.f32 %v380, %v380
        %v749 = vmul.f32 %v491, %v491
        %v750 = vmul.f32 %v493, %v493
        %v751 = vmul.f32 %v382, %v382
        %v752 = vmul.f32 %v384, %v384
        %v753 = vmul.f32 %v495, %v495
        %v754 = vmul.f32 %v497, %v497
        %v755 = vmul.f32 %v388, %v388
        %v756 = vmul.f32 %v390, %v390
        %v757 = vmul.f32 %v501, %v501
        %v758 = vmul.f32 %v503, %v503
        %v759 = vmul.f32 %v392, %v392
        %v760 = vmul.f32 %v394, %v394
        %v761 = vmul.f32 %v505, %v505
        %v762 = vmul.f32 %v507, %v507
        %v763 = vmul.f32 %v398, %v398
        %v764 = vmul.f32 %v400, %v400
        %v765 = vmul.f32 %v511, %v511
        %v766 = vmul.f32 %v513, %v513
        %v767 = vmul.f32 %v402, %v402
        %v768 = vmul.f32 %v404, %v404
        %v769 = vmul.f32 %v515, %v515
        %v770 = vmul.f32 %v517, %v517
        %v771 = vmul.f32 %v408, %v408
        %v772 = vmul.f32 %v410, %v410
        %v773 = vmul.f32 %v521, %v521
        %v774 = vmul.f32 %v523, %v523
        %v775 = vmul.f32 %v412, %v412
        %v776 = vmul.f32 %v414, %v414
        %v777 = vmul.f32 %v525, %v525
        %v778 = vmul.f32 %v527, %v527
        %v779 = vmul.f32 %v418, %v418
        %v780 = vmul.f32 %v420, %v420
        %v781 = vmul.f32 %v531, %v531
        %v782 = vmul.f32 %v533, %v533
        %v783 = vmul.f32 %v422, %v422
        %v784 = vmul.f32 %v424, %v424
        %v785 = vmul.f32 %v535, %v535
        %v786 = vmul.f32 %v537, %v537
        %v787 = vmul.f32 %v428, %v428
        %v788 = vmul.f32 %v430, %v430
        %v789 = vmul.f32 %v541, %v541
        %v790 = vmul.f32 %v543, %v543
        %v791 = vmul.f32 %v432, %v432
        %v792 = vmul.f32 %v434, %v434
        %v793 = vmul.f32 %v545, %v545
        %v794 = vmul.f32 %v547, %v547
        %v795 = vadd.f32 %v731, %v735
        %v796 = vadd.f32 %v795, %v739
        %v797 = vadd.f32 %v796, %v743
        %v798 = vadd.f32 %v797, %v747
        %v799 = vadd.f32 %v798, %v751
        %v800 = vadd.f32 %v799, %v755
        %v801 = vadd.f32 %v800, %v759
        %v802 = vadd.f32 %v801, %v763
        %v803 = vadd.f32 %v802, %v767
        %v804 = vadd.f32 %v803, %v771
        %v805 = vadd.f32 %v804, %v775
        %v806 = vadd.f32 %v805, %v779
        %v807 = vadd.f32 %v806, %v783
        %v808 = vadd.f32 %v807, %v787
        %v809 = vadd.f32 %v808, %v791
        %v810 = vrot.slane %v809, 4
        %v811 = vadd.f32 %v809, %v810
        %v812 = vrot.slane %v811, 2
        %v813 = vadd.f32 %v811, %v812
        %v814 = vrot.slane %v813, 1
        %v815 = vadd.f32 %v813, %v814
        %v816 = vadd.f32 %v732, %v736
        %v817 = vadd.f32 %v816, %v740
        %v818 = vadd.f32 %v817, %v744
        %v819 = vadd.f32 %v818, %v748
        %v820 = vadd.f32 %v819, %v752
        %v821 = vadd.f32 %v820, %v756
        %v822 = vadd.f32 %v821, %v760
        %v823 = vadd.f32 %v822, %v764
        %v824 = vadd.f32 %v823, %v768
        %v825 = vadd.f32 %v824, %v772
        %v826 = vadd.f32 %v825, %v776
        %v827 = vadd.f32 %v826, %v780
        %v828 = vadd.f32 %v827, %v784
        %v829 = vadd.f32 %v828, %v788
        %v830 = vadd.f32 %v829, %v792
        %v831 = vrot.slane %v830, 4
        %v832 = vadd.f32 %v830, %v831
        %v833 = vrot.slane %v832, 2
        %v834 = vadd.f32 %v832, %v833
        %v835 = vrot.slane %v834, 1
        %v836 = vadd.f32 %v834, %v835
        %v837 = vadd.f32 %v733, %v737
        %v838 = vadd.f32 %v837, %v741
        %v839 = vadd.f32 %v838, %v745
        %v840 = vadd.f32 %v839, %v749
        %v841 = vadd.f32 %v840, %v753
        %v842 = vadd.f32 %v841, %v757
        %v843 = vadd.f32 %v842, %v761
        %v844 = vadd.f32 %v843, %v765
        %v845 = vadd.f32 %v844, %v769
        %v846 = vadd.f32 %v845, %v773
        %v847 = vadd.f32 %v846, %v777
        %v848 = vadd.f32 %v847, %v781
        %v849 = vadd.f32 %v848, %v785
        %v850 = vadd.f32 %v849, %v789
        %v851 = vadd.f32 %v850, %v793
        %v852 = vrot.slane %v851, 4
        %v853 = vadd.f32 %v851, %v852
        %v854 = vrot.slane %v853, 2
        %v855 = vadd.f32 %v853, %v854
        %v856 = vrot.slane %v855, 1
        %v857 = vadd.f32 %v855, %v856
        %v858 = vadd.f32 %v734, %v738
        %v859 = vadd.f32 %v858, %v742
        %v860 = vadd.f32 %v859, %v746
        %v861 = vadd.f32 %v860, %v750
        %v862 = vadd.f32 %v861, %v754
        %v863 = vadd.f32 %v862, %v758
        %v864 = vadd.f32 %v863, %v762
        %v865 = vadd.f32 %v864, %v766
        %v866 = vadd.f32 %v865, %v770
        %v867 = vadd.f32 %v866, %v774
        %v868 = vadd.f32 %v867, %v778
        %v869 = vadd.f32 %v868, %v782
        %v870 = vadd.f32 %v869, %v786
        %v871 = vadd.f32 %v870, %v790
        %v872 = vadd.f32 %v871, %v794
        %v873 = vrot.slane %v872, 4
        %v874 = vadd.f32 %v872, %v873
        %v875 = vrot.slane %v874, 2
        %v876 = vadd.f32 %v874, %v875
        %v877 = vrot.slane %v876, 1
        %v878 = vadd.f32 %v876, %v877
        %v883 = vcombine.low %v815, %v836
        %v884 = vcombine.low %v857, %v878
        %v886 = vunpack.c.l.s4 1966171168
        %v887 = vunpack.c.0.s8 %v886
        %v888 = vlaneseq
        %v889 = vshrl.u32 %v888, 7
        %v890 = vsub.s32 %v887, %v889
        %v891 = vrot.slane %v883, %v890
        %v893 = vunpack.c.l.s4 1966171168
        %v894 = vunpack.c.0.s8 %v893
        %v895 = vlaneseq
        %v896 = vshrl.u32 %v895, 7
        %v897 = vsub.s32 %v894, %v896
        %v898 = vrot.slane %v884, %v897
        %v899 = vcombine.low %v891, %v898
        %v901 = vunpack.c.l.s4 1966171168
        %v902 = vunpack.c.0.s8 %v901
        %v903 = vlaneseq
        %v904 = vshrl.u32 %v903, 7
        %v905 = vsub.s32 %v902, %v904
        %v906 = vrot.slane %v899, %v905
        %908 = vst.msk [vmem:[%s209] sm:$0xf] %vm729, %v906
        %s909 = sand.u32 %s77, 1
        %s910 = scalar_lea.sflag [#allocation3], %s909
        %s911 = sand.u32 %s77, 1
        %s912 = smul.addr %s911, 512
        %s913 = scalar_lea.vmem [#allocation2], %s912
        %s914 = sand.u32 %s22, 1
        %s915 = scalar_lea.sflag [#allocation5], %s914
        %s916 = sand.u32 %s103, 1
        %s917 = smul.addr %s916, 4
        %s918 = scalar_lea.vmem [#allocation4], %s917
        %s919 = sand.u32 %s22, 1
        %s920 = scalar_lea.sflag [#allocation5], %s919
        %s921 = sand.u32 %s129, 1
        %s922 = smul.addr %s921, 4
        %s923 = scalar_lea.vmem [#allocation6], %s922
        // Predicated region
        $region29: #{tpu_custom_call.1} parent=27 // pred_check
          %p924 = pneg %p87
        $region30: #{tpu_custom_call.1} parent=27 // pred_check_branch
          %926 = sbr.rel (%p924) target = $region32
        $region31: #{tpu_custom_call.1} parent=27 // pred_region
          %s927 = smul.u32 16, %s22
          %s929 = ssub.s32 8192, 8192
          %930 = vsyncadd %s910, %s929
          %s931 = smul.addr %s927, 4
          %s932 = smul.addr %s931, 128
          %s933 = scalar_lea.hbm %s2, %s932
          %s934 = sshll.u32 %s913, 4
          %s935 = int_to_ptr.vmem [resolvable:$true] %s934
          %940 = dma.vmem_to_hbm [thread:$0]  %s935, 8192, %s933, %s910, 512, 512, 32
        $region32: #{tpu_custom_call.1} parent=27 // pred_fallthru
          _
        // Predicated region
        $region33: #{tpu_custom_call.1} parent=27 // pred_check
          %p941 = pneg %p113
        $region34: #{tpu_custom_call.1} parent=27 // pred_check_branch
          %943 = sbr.rel (%p941) target = $region36
        $region35: #{tpu_custom_call.1} parent=27 // pred_region
          %s945 = ssub.s32 64, 64
          %946 = vsyncadd %s915, %s945
          %s947 = smul.addr %s22, 4
          %s948 = smul.addr %s947, 16
          %s949 = scalar_lea.hbm %s3, %s948
          %s951 = sshll.u32 %s918, 4
          %s952 = int_to_ptr.vmem [resolvable:$true] %s951
          %954 = dma.vmem_to_hbm [thread:$0]  %s952, 64, %s949, %s915
        $region36: #{tpu_custom_call.1} parent=27 // pred_fallthru
          _
        // Predicated region
        $region37: #{tpu_custom_call.1} parent=27 // pred_check
          %p955 = pneg %p139
        $region38: #{tpu_custom_call.1} parent=27 // pred_check_branch
          %957 = sbr.rel (%p955) target = $region40
        $region39: #{tpu_custom_call.1} parent=27 // pred_region
          %s959 = ssub.s32 64, 64
          %960 = vsyncadd %s920, %s959
          %s961 = smul.addr %s22, 4
          %s962 = smul.addr %s961, 16
          %s963 = scalar_lea.hbm %s4, %s962
          %s965 = sshll.u32 %s923, 4
          %s966 = int_to_ptr.vmem [resolvable:$true] %s965
          %968 = dma.vmem_to_hbm [thread:$0]  %s966, 64, %s963, %s920
        $region40: #{tpu_custom_call.1} parent=27 // pred_fallthru
          _
      $region28: #{tpu_custom_call.1} parent=5 // pred_fallthru
        _
      %p969 = scmp.le.s32.totalorder 2, %s17
      // Predicated region
      $region41: #{tpu_custom_call.1} parent=5 // pred_check
        %p970 = pneg %p969
      $region42: #{tpu_custom_call.1} parent=5 // pred_check_branch
        %972 = sbr.rel (%p970) target = $region44
      $region43: #{tpu_custom_call.1} parent=5 // pred_region
        %s973 = ssub.s32 %s17, 2
        // Predicated region
        $region45: #{tpu_custom_call.1} parent=43 // pred_check
          %p974 = pneg %p93
        $region46: #{tpu_custom_call.1} parent=43 // pred_check_branch
          %976 = sbr.rel (%p974) target = $region48
        $region47: #{tpu_custom_call.1} parent=43 // pred_region
          %s977 = sand.u32 %s78, 1
          %s978 = scalar_lea.sflag [#allocation3], %s977
          %s979 = sand.u32 %s78, 1
          %s980 = smul.addr %s979, 512
          %s981 = scalar_lea.vmem [#allocation2], %s980
          %982 = dma.done %s978, 8192
        $region48: #{tpu_custom_call.1} parent=43 // pred_fallthru
          _
        // Predicated region
        $region49: #{tpu_custom_call.1} parent=43 // pred_check
          %p983 = pneg %p119
        $region50: #{tpu_custom_call.1} parent=43 // pred_check_branch
          %985 = sbr.rel (%p983) target = $region52
        $region51: #{tpu_custom_call.1} parent=43 // pred_region
          %s986 = sand.u32 %s23, 1
          %s987 = scalar_lea.sflag [#allocation5], %s986
          %s988 = sand.u32 %s104, 1
          %s989 = smul.addr %s988, 4
          %s990 = scalar_lea.vmem [#allocation4], %s989
          %991 = dma.done %s987, 64
        $region52: #{tpu_custom_call.1} parent=43 // pred_fallthru
          _
        // Predicated region
        $region53: #{tpu_custom_call.1} parent=43 // pred_check
          %p992 = pneg %p145
        $region54: #{tpu_custom_call.1} parent=43 // pred_check_branch
          %994 = sbr.rel (%p992) target = $region56
        $region55: #{tpu_custom_call.1} parent=43 // pred_region
          %s995 = sand.u32 %s23, 1
          %s996 = scalar_lea.sflag [#allocation5], %s995
          %s997 = sand.u32 %s130, 1
          %s998 = smul.addr %s997, 4
          %s999 = scalar_lea.vmem [#allocation6], %s998
          %1000 = dma.done %s996, 64
        $region56: #{tpu_custom_call.1} parent=43 // pred_fallthru
          _
      $region44: #{tpu_custom_call.1} parent=5 // pred_fallthru
        _
    $region6: #{tpu_custom_call.1} parent=1 // loop_footer
      %s21 = sadd.s32 1, %s17
    $region7: #{tpu_custom_call.1} parent=1 // loop_footer_branch
      %16 = sbr.rel target = $region3
    $region8: #{tpu_custom_call.1} parent=1 // loop_exit
      _
    %1001 = vsyncpa [#allocation3], 1
    %s1002 = scalar_lea.sflag [#allocation3], 1
    %1003 = vsyncpa %s1002, 1
    %1004 = vsyncpa [#allocation5], 1
    %s1005 = scalar_lea.sflag [#allocation5], 1
    %1006 = vsyncpa %s1005, 1

</llo_original>
